<compile_context>
chip_gen: v7x
topology: tpu7x:2x2x1
jax: 0.10.0
libtpu: 0.0.40
codegen_flags: <defaults>
</compile_context>

<pallas_src>
import functools

import jax
import jax.numpy as jnp
from jax import lax
from jax.experimental import pallas as pl
from jax.experimental.pallas import tpu as pltpu

BN_EPS = 1e-5
VMEM_LIMIT = 32 * 1024 * 1024    # explicit scoped-VMEM limit (safe on v5e/v6e/v7x)
ROW_TILE_TARGET = 1024           # rows of (Wo, C) per epilogue/shortcut grid step


# ----------------------------------------------------------------------------
# Small static helpers (trace-time only).
# ----------------------------------------------------------------------------
def _round_up(x, m):
    return (x + m - 1) // m * m


def _ceil_div(a, b):
    return -(-a // b)


def _pick_row_tile(r, target=ROW_TILE_TARGET):
    """Return (tile_rows, padded_rows).  Prefers 256/8-aligned tiles and pads
    the row count up for awkward r instead of degrading to tiny/huge tiles."""
    if r <= target:
        return r, r
    for step in (256, 8):                       # prefer MXU/vreg aligned tiles
        best = 0
        t = step
        while t <= target:
            if r % t == 0:
                best = t
            t += step
        if best:
            return best, r
    return target, _round_up(r, target)


def _pad_rows(a, r_pad):
    r = a.shape[0]
    if r_pad == r:
        return a
    return jnp.pad(a, ((0, r_pad - r),) + ((0, 0),) * (a.ndim - 1))


def _mosaic_params(*semantics):
    return pltpu.CompilerParams(dimension_semantics=tuple(semantics),
                                vmem_limit_bytes=VMEM_LIMIT)


def _strided_view(x_nhwc, stride):
    """Free (reshape-only, after an optional never-read edge pad) view of NHWC
    x such that view[r, 0, j, :Cin] == x[n, i*stride, j*stride, :] with
    r = n*Ho + i.  Shape: (N*Ho, stride, Wo, stride*Cin).  Handles odd H/W
    (ceil-mode MaxPool2d(1, stride))."""
    n, h, w, c = x_nhwc.shape
    ho, wo = _ceil_div(h, stride), _ceil_div(w, stride)
    hp, wp = ho * stride, wo * stride
    if (hp, wp) != (h, w):
        x_nhwc = jnp.pad(x_nhwc, ((0, 0), (0, hp - h), (0, wp - w), (0, 0)))
    return x_nhwc.reshape(n * ho, stride, wo, stride * c), (n, ho, wo)


# ----------------------------------------------------------------------------
# IdentityShortcut kernel (the spec module):
#   out[n, i, j, c] = x[n, i*stride, j*stride, c]  for c < Cin, else 0
# Stride is handled entirely by the free strided view + BlockSpec index_map;
# the kernel builds the channel-padded tile in registers and does ONE
# full-width store (no zero-fill + masked partial overwrite).
# ----------------------------------------------------------------------------
def _make_shortcut_kernel(cin, cout):
    def kernel(x_ref, o_ref):
        # x_ref: (t_r, Wo, stride*Cin); lane j = dw*Cin + c, so the first Cin
        # lanes are exactly the W-offset-0 (MaxPool2d(1, stride)) samples.
        val = x_ref[:, :, :cin]
        if cout > cin:
            val = jnp.concatenate(
                [val, jnp.zeros(val.shape[:-1] + (cout - cin,), val.dtype)],
                axis=-1)
        o_ref[...] = val                       # single unmasked full-tile store
    return kernel


def identity_shortcut_nhwc(x_nhwc, num_filters, stride):
    cin = x_nhwc.shape[-1]
    assert num_filters >= cin, "IdentityShortcut only adds channels"
    view, (n, ho, wo) = _strided_view(x_nhwc, stride)
    r = n * ho                                  # flat row grid folds the batch
    t_r, r_pad = _pick_row_tile(r)
    view = _pad_rows(view, r_pad)
    out = pl.pallas_call(
        _make_shortcut_kernel(cin, num_filters),
        grid=(r_pad // t_r,),
        in_specs=[pl.BlockSpec((t_r, None, wo, stride * cin),
                               lambda i: (i, 0, 0, 0))],
        out_specs=pl.BlockSpec((t_r, wo, num_filters), lambda i: (i, 0, 0)),
        out_shape=jax.ShapeDtypeStruct((r_pad, wo, num_filters), x_nhwc.dtype),
        compiler_params=_mosaic_params("parallel"),
    )(view)
    return out[:r].reshape(n, ho, wo, num_filters)


@functools.partial(jax.jit, static_argnames=("num_filters", "stride"))
def identity_shortcut_forward(x_nchw, num_filters, stride):
    """NCHW wrapper matching the PyTorch IdentityShortcut module exactly."""
    # TODO(synk): in a full NHWC network these boundary transposes disappear.
    x = jnp.transpose(x_nchw, (0, 2, 3, 1))
    out = identity_shortcut_nhwc(x, num_filters, stride)
    return jnp.transpose(out, (0, 3, 1, 2))


# ----------------------------------------------------------------------------
# Conv kernel: in-kernel 3x3 patch formation (no im2col slab in HBM), one fat
# bf16 MXU matmul per image with f32 accumulation, bf16 conv output, exact f32
# per-image partial BN statistics.
# ----------------------------------------------------------------------------
def _make_conv_kernel(stride, cin, ho, wo, cout):
    def kernel(x_ref, w_ref, o_ref, st_ref):
        # x_ref: (Hq, stride, Wq, stride*Cin) bf16 -- padded image, phase-split
        # view, so every tap below is a *static, unit-stride* slice.
        v = x_ref[...]
        taps = []
        for dy in range(3):
            for dx in range(3):
                taps.append(v[dy // stride: dy // stride + ho,
                              dy % stride,
                              dx // stride: dx // stride + wo,
                              (dx % stride) * cin: (dx % stride + 1) * cin])
        lhs = jnp.concatenate(taps, axis=-1).reshape(ho * wo, 9 * cin)
        acc = jnp.dot(lhs, w_ref[...], preferred_element_type=jnp.float32)
        o_ref[...] = acc.reshape(ho, wo, cout).astype(o_ref.dtype)   # bf16 store
        # BN partial sums accumulated exactly in f32 from the f32 MXU result.
        st_ref[:, 0, :] = jnp.sum(acc, axis=0, keepdims=True)
        st_ref[:, 1, :] = jnp.sum(acc * acc, axis=0, keepdims=True)
    return kernel


def _conv3x3_bn_stats(x_nhwc_bf16, w_folded_bf16, stride):
    """3x3 conv (pad=1, given stride) gridded one image per step."""
    n, h, w, cin = x_nhwc_bf16.shape
    cout = w_folded_bf16.shape[1]
    ho, wo = _ceil_div(h, stride), _ceil_div(w, stride)
    # pad=1 each side; round the padded extent up to a multiple of `stride` so
    # the phase-split reshape is free (the extra rows/cols are never read).
    hp, wp = _round_up(h + 2, stride), _round_up(w + 2, stride)
    xp = jnp.pad(x_nhwc_bf16, ((0, 0), (1, hp - h - 1), (1, wp - w - 1), (0, 0)))
    hq, wq = hp // stride, wp // stride
    view = xp.reshape(n, hq, stride, wq, stride * cin)      # free view
    conv_out, part = pl.pallas_call(
        _make_conv_kernel(stride, cin, ho, wo, cout),
        grid=(n,),
        in_specs=[pl.BlockSpec((None, hq, stride, wq, stride * cin),
                               lambda i: (i, 0, 0, 0, 0)),
                  pl.BlockSpec((9 * cin, cout), lambda i: (0, 0))],
        out_specs=[pl.BlockSpec((None, ho, wo, cout), lambda i: (i, 0, 0, 0)),
                   pl.BlockSpec((1, 2, cout), lambda i: (i, 0, 0))],
        out_shape=[jax.ShapeDtypeStruct((n, ho, wo, cout), jnp.bfloat16),
                   jax.ShapeDtypeStruct((n, 2, cout), jnp.float32)],
        compiler_params=_mosaic_params("parallel"),
    )(view, w_folded_bf16)
    return conv_out, part


# ----------------------------------------------------------------------------
# BN epilogue (pass 2): scale/shift (+ fused IdentityShortcut residual) + ReLU.
# Flat row grid folds the batch; all slabs are Cout lanes (no 128 padding).
# ----------------------------------------------------------------------------
def _make_epilogue_kernel(cin_res, cout, with_residual):
    def kernel(*refs):
        if with_residual:
            x_ref, r_ref, sc_ref, sh_ref, o_ref = refs
        else:
            x_ref, sc_ref, sh_ref, o_ref = refs
        y = x_ref[...].astype(jnp.float32) * sc_ref[...] + sh_ref[...]
        if with_residual:
            # Fused IdentityShortcut: first Cin lanes of the strided view are
            # the subsampled pixels; zero-extend to Cout lanes in registers.
            res = r_ref[:, :, :cin_res].astype(jnp.float32)
            if cout > cin_res:
                res = jnp.concatenate(
                    [res, jnp.zeros(res.shape[:-1] + (cout - cin_res,),
                                    res.dtype)], axis=-1)
            y = y + res
        o_ref[...] = jnp.maximum(y, 0.0).astype(o_ref.dtype)
    return kernel


def _bn_epilogue(conv_out_nhwc, scale, shift, out_dtype,
                 residual_view=None, cin_res=0, stride=1):
    n, ho, wo, cout = conv_out_nhwc.shape
    r = n * ho
    conv_rows = conv_out_nhwc.reshape(r, wo, cout)           # free collapse
    t_r, r_pad = _pick_row_tile(r)
    conv_rows = _pad_rows(conv_rows, r_pad)
    row_spec = pl.BlockSpec((t_r, wo, cout), lambda i: (i, 0, 0))
    vec_spec = pl.BlockSpec((1, 1, cout), lambda i: (0, 0, 0))
    if residual_view is None:
        kernel = _make_epilogue_kernel(0, cout, False)
        in_specs = [row_spec, vec_spec, vec_spec]
        args = (conv_rows, scale, shift)
    else:
        residual_view = _pad_rows(residual_view, r_pad)
        kernel = _make_epilogue_kernel(cin_res, cout, True)
        res_spec = pl.BlockSpec((t_r, None, wo, stride * cin_res),
                                lambda i: (i, 0, 0, 0))
        in_specs = [row_spec, res_spec, vec_spec, vec_spec]
        args = (conv_rows, residual_view, scale, shift)
    out = pl.pallas_call(
        kernel,
        grid=(r_pad // t_r,),
        in_specs=in_specs,
        out_specs=row_spec,
        out_shape=jax.ShapeDtypeStruct((r_pad, wo, cout), out_dtype),
        compiler_params=_mosaic_params("parallel"),
    )(*args)
    return out[:r].reshape(n, ho, wo, cout)


# ----------------------------------------------------------------------------
# Tiny XLA glue: BN finalize + weight folding.
# ----------------------------------------------------------------------------
def _finalize_bn(part_stats, gamma, beta, count):
    s = jnp.sum(part_stats, axis=0)                       # (2, Cout) f32
    mean = s[0] / count
    var = jnp.maximum(s[1] / count - mean * mean, 0.0)    # biased batch variance
    # TODO(synk): E[x^2]-E[x]^2 can cancel for large-mean channels; switch to a
    # mean-subtracted/Welford accumulation if stats must match bit-for-bit.
    scale = gamma.astype(jnp.float32) * lax.rsqrt(var + BN_EPS)
    shift = beta.astype(jnp.float32) - mean * scale
    return scale.reshape(1, 1, -1), shift.reshape(1, 1, -1)


def _fold_weight(w_oihw):
    # (Cout, Cin, 3, 3) -> (3, 3, Cin, Cout) -> (9*Cin, Cout), Cout lanes only.
    cout, cin, kh, kw = w_oihw.shape
    wk = jnp.transpose(w_oihw, (2, 3, 1, 0)).reshape(kh * kw * cin, cout)
    return wk.astype(jnp.bfloat16)


# ----------------------------------------------------------------------------
# BasicBlock forward (NCHW in / NCHW out), PyTorch training-mode BN semantics,
# with the IdentityShortcut fused into the conv2 epilogue.
# ----------------------------------------------------------------------------
@functools.partial(jax.jit, static_argnames=("stride",))
def basic_block_forward(x_nchw, params, stride=1):
    w1, g1, b1, w2, g2, b2 = (params["w1"], params["g1"], params["b1"],
                              params["w2"], params["g2"], params["b2"])
    cin = x_nchw.shape[1]
    # TODO(synk): boundary NCHW<->NHWC transposes would be hoisted network-wide.
    x = jnp.transpose(x_nchw, (0, 2, 3, 1)).astype(jnp.float32)   # NHWC

    # ---- conv1 + bn1 + relu1 (bf16 conv output, bf16 y1 feeds conv2) --------
    conv1, part1 = _conv3x3_bn_stats(x.astype(jnp.bfloat16),
                                     _fold_weight(w1), stride)
    n, ho, wo, _ = conv1.shape
    m = n * ho * wo
    sc1, sh1 = _finalize_bn(part1, g1, b1, m)
    y1 = _bn_epilogue(conv1, sc1, sh1, jnp.bfloat16)              # (N,Ho,Wo,Cout)

    # ---- conv2 + bn2 + fused IdentityShortcut residual + relu2 --------------
    conv2, part2 = _conv3x3_bn_stats(y1, _fold_weight(w2), 1)
    sc2, sh2 = _finalize_bn(part2, g2, b2, m)
    res_view, _ = _strided_view(x, stride)                        # free view of x
    y2 = _bn_epilogue(conv2, sc2, sh2, jnp.float32,
                      residual_view=res_view, cin_res=cin, stride=stride)

    return jnp.transpose(y2, (0, 3, 1, 2))                        # NCHW


# ----------------------------------------------------------------------------
# Pure-JAX references.
# ----------------------------------------------------------------------------
def identity_shortcut_reference(x_nchw, num_filters, stride):
    pad = num_filters - x_nchw.shape[1]
    out = jnp.pad(x_nchw, ((0, 0), (0, pad), (0, 0), (0, 0)))
    return out[:, :, ::stride, ::stride]


def _bn_train_ref(x, gamma, beta):
    mean = jnp.mean(x, axis=(0, 2, 3), keepdims=True)
    var = jnp.mean(jnp.square(x - mean), axis=(0, 2, 3), keepdims=True)
    return ((x - mean) * lax.rsqrt(var + BN_EPS) * gamma.reshape(1, -1, 1, 1)
            + beta.reshape(1, -1, 1, 1))


def basic_block_reference(x, params, stride=1):
    w1, g1, b1, w2, g2, b2 = (params["w1"], params["g1"], params["b1"],
                              params["w2"], params["g2"], params["b2"])
    dn = ("NCHW", "OIHW", "NCHW")

    def conv(inp, w, s):
        return lax.conv_general_dilated(
            inp.astype(jnp.bfloat16), w.astype(jnp.bfloat16), (s, s),
            ((1, 1), (1, 1)), dimension_numbers=dn,
            preferred_element_type=jnp.float32)

    out = jnp.maximum(_bn_train_ref(conv(x, w1, stride), g1, b1), 0.0)
    out = _bn_train_ref(conv(out, w2, 1), g2, b2)
    res = identity_shortcut_reference(x, w1.shape[0], stride)
    return jnp.maximum(out + res, 0.0)


# ----------------------------------------------------------------------------
if __name__ == "__main__":
    key = jax.random.PRNGKey(0)
    k_x, k_x2, k_w1, k_w2, k_g1, k_b1, k_g2, k_b2 = jax.random.split(key, 8)

    N, CIN, COUT, H, W, STRIDE = 2, 4, 8, 16, 16, 2
    x = jax.random.normal(k_x, (N, CIN, H, W), dtype=jnp.float32)

    # 1) IdentityShortcut (the spec module) on its own: exact data movement.
    sc = jax.block_until_ready(identity_shortcut_forward(
        x, num_filters=COUT, stride=STRIDE))
    sc_ref = identity_shortcut_reference(x, COUT, STRIDE)
    assert sc.shape == sc_ref.shape, (sc.shape, sc_ref.shape)
    assert float(jnp.max(jnp.abs(sc - sc_ref))) < 1e-6

    # 1b) odd spatial size (ceil-mode MaxPool2d(1, stride)) coverage fix.
    x_odd = jax.random.normal(k_x2, (N, CIN, 15, 15), dtype=jnp.float32)
    sc_odd = jax.block_until_ready(identity_shortcut_forward(
        x_odd, num_filters=COUT, stride=STRIDE))
    sc_odd_ref = identity_shortcut_reference(x_odd, COUT, STRIDE)
    assert sc_odd.shape == sc_odd_ref.shape, (sc_odd.shape, sc_odd_ref.shape)
    assert float(jnp.max(jnp.abs(sc_odd - sc_odd_ref))) < 1e-6

    # 2) Full fused BasicBlock built around the fused shortcut.
    def conv_init(k, cout, cin):
        fan_in = cin * 9
        return jax.random.normal(k, (cout, cin, 3, 3), jnp.float32) * (2.0 / fan_in) ** 0.5

    params = {
        "w1": conv_init(k_w1, COUT, CIN),
        "g1": 1.0 + 0.1 * jax.random.normal(k_g1, (COUT,), jnp.float32),
        "b1": 0.1 * jax.random.normal(k_b1, (COUT,), jnp.float32),
        "w2": conv_init(k_w2, COUT, COUT),
        "g2": 1.0 + 0.1 * jax.random.normal(k_g2, (COUT,), jnp.float32),
        "b2": 0.1 * jax.random.normal(k_b2, (COUT,), jnp.float32),
    }

    out = jax.block_until_ready(basic_block_forward(x, params, stride=STRIDE))
    ref = basic_block_reference(x, params, stride=STRIDE)
    assert out.shape == (N, COUT, H // STRIDE, W // STRIDE), out.shape
    err = float(jnp.max(jnp.abs(out - ref)))
    # bf16 MXU inputs + bf16 conv-output storage (perf feedback item 5):
    # tolerance sized for ~2^-9 relative rounding propagated through two convs.
    assert err < 5e-2, err

    print("KERNEL_OK")
</pallas_src>

<mosaic_0001>
module attributes {stable_mosaic.version = 11 : i64} {
  func.func @kernel(%arg0: i32, %arg1: memref<16x1x8x8xf32, #tpu.memory_space<vmem>>, %arg2: memref<16x8x8xf32, #tpu.memory_space<vmem>>) attributes {dimension_semantics = [#tpu.dimension_semantics<parallel>], iteration_bounds = array<i64: 1>, scalar_prefetch = 0 : i64, scratch_operands = 0 : i64, tpu.core_type = #tpu.core_type<tc>, window_params = [{transform_indices = @transform_0, window_bounds = array<i64: 16, 1, 8, 8>}, {transform_indices = @transform_1, window_bounds = array<i64: 16, 8, 8>}]} {
    %c0 = arith.constant 0 : index
    %c0_0 = arith.constant 0 : index
    %c0_1 = arith.constant 0 : index
    %c0_2 = arith.constant 0 : index
    %0 = vector.load %arg1[%c0, %c0_0, %c0_1, %c0_2] : memref<16x1x8x8xf32, #tpu.memory_space<vmem>>, vector<16x1x8x4xf32>
    %1 = vector.shape_cast %0 : vector<16x1x8x4xf32> to vector<16x8x4xf32>
    %cst = arith.constant 0.000000e+00 : f32
    %2 = vector.broadcast %cst : f32 to vector<16x8x4xf32>
    %3 = tpu.concatenate %1, %2 in 2 : vector<16x8x4xf32>, vector<16x8x4xf32> -> vector<16x8x8xf32>
    %c0_3 = arith.constant 0 : index
    %c0_4 = arith.constant 0 : index
    %c0_5 = arith.constant 0 : index
    %4 = vector.load %arg2[%c0_3, %c0_4, %c0_5] : memref<16x8x8xf32, #tpu.memory_space<vmem>>, vector<16x8x8xf32>
    tpu.vector_store %arg2[%c0_3, %c0_4, %c0_5], %3 {strides = array<i32>} : memref<16x8x8xf32, #tpu.memory_space<vmem>>, vector<16x8x8xf32>,
    return
  }
  func.func @transform_0(%arg0: i32) -> (i32, i32, i32, i32) {
    %c0_i32 = arith.constant 0 : i32
    %c0_i32_0 = arith.constant 0 : i32
    %c0_i32_1 = arith.constant 0 : i32
    %c0_i32_2 = arith.constant 0 : i32
    return %arg0, %c0_i32, %c0_i32_0, %c0_i32_1 : i32, i32, i32, i32
  }
  func.func @transform_1(%arg0: i32) -> (i32, i32, i32) {
    %c0_i32 = arith.constant 0 : i32
    %c0_i32_0 = arith.constant 0 : i32
    %c0_i32_1 = arith.constant 0 : i32
    return %arg0, %c0_i32, %c0_i32_0 : i32, i32, i32
  }
}

</mosaic_0001>

<llo_original>
// kernel: identity_shortcut_forward.1
$region0: #{identity_shortcut_forward.1}
  #allocation0 [shape = 'u32[]', space=smem, size = 0x4, offset = 0x4, fixed_abs, tag = 'smem constant byte address 0x4 - core index']
  #allocation1 [shape = 'u32[144,128]{1,0:T(1,128)}', space=vmem, size = 0x12000, scoped, tag = 'internal scratch']
  %s0 = inlined_call_operand.vmem [shape: f32[16,2,8,8], index: 0, kind: input, shape index: {}]
  %s1 = inlined_call_operand.vmem [shape: f32[16,8,8], index: 1, kind: output, shape index: {}]
  %s2 = sld [smem:[#allocation0]]
  $region52: #{identity_shortcut_forward.1} parent=0
    _
  %s4 = ssub.s32 1, %s2
  %s5 = scalar_select 0, %s4, %s2
  $region1: #{identity_shortcut_forward.1} parent=0
    #allocation2 [shape = 'u8[65536]{0}', space=vmem, size = 0x10000, scoped, tag = 'input window, operand 0, single buffered']
    // Predicated region
    $region2: #{identity_shortcut_forward.1} parent=1 // pred_check
      _
    $region3: #{identity_shortcut_forward.1} parent=1 // pred_check_branch
      %7 = sbr.rel (0) target = $region5
    $region4: #{identity_shortcut_forward.1} parent=1 // pred_region
      // Predicated region
      $region6: #{identity_shortcut_forward.1} parent=4 // pred_check
        _
      $region7: #{identity_shortcut_forward.1} parent=4 // pred_check_branch
        %9 = sbr.rel (0) target = $region9
      $region8: #{identity_shortcut_forward.1} parent=4 // pred_region
        // Predicated region
        $region10: #{identity_shortcut_forward.1} parent=8 // pred_check
          _
        $region11: #{identity_shortcut_forward.1} parent=8 // pred_check_branch
          %11 = sbr.rel (0) target = $region13
        $region12: #{identity_shortcut_forward.1} parent=8 // pred_region
          // Predicated region
          $region25: #{identity_shortcut_forward.1} parent=12 // pred_check
            _
          $region26: #{identity_shortcut_forward.1} parent=12 // pred_check_branch
            %56 = sbr.rel (0) target = $region28
          $region27: #{identity_shortcut_forward.1} parent=12 // pred_region
            loop: start=0, step=1, limit=1
            $region29: #{identity_shortcut_forward.1} parent=27 // loop_pre_header
              _
            $region30: #{identity_shortcut_forward.1} parent=27 // loop_header
              %s58 = sphi 0, %s62
              %p59 = scmp.ge.s32.totalorder %s58, 1
              %s63 = sphi %s0, %s0
              %s64 = sphi [#allocation2], [#allocation2]
            $region31: #{identity_shortcut_forward.1} parent=27 // loop_header_branch
              %61 = sbr.rel (%p59) target = $region35
            $region32: #{identity_shortcut_forward.1} parent=27 // loop_body
              %v65 = vld [vmem:[%s63] sm:$0xff]
              %66 = vst [vmem:[%s64] sm:$0xff] %v65
              %v67 = vld [vmem:[%s63 + $0x10] sm:$0xff]
              %68 = vst [vmem:[%s64 + $0x8] sm:$0xff] %v67
              %v69 = vld [vmem:[%s63 + $0x20] sm:$0xff]
              %70 = vst [vmem:[%s64 + $0x10] sm:$0xff] %v69
              %v71 = vld [vmem:[%s63 + $0x30] sm:$0xff]
              %72 = vst [vmem:[%s64 + $0x18] sm:$0xff] %v71
              %v73 = vld [vmem:[%s63 + $0x40] sm:$0xff]
              %74 = vst [vmem:[%s64 + $0x20] sm:$0xff] %v73
              %v75 = vld [vmem:[%s63 + $0x50] sm:$0xff]
              %76 = vst [vmem:[%s64 + $0x28] sm:$0xff] %v75
              %v77 = vld [vmem:[%s63 + $0x60] sm:$0xff]
              %78 = vst [vmem:[%s64 + $0x30] sm:$0xff] %v77
              %v79 = vld [vmem:[%s63 + $0x70] sm:$0xff]
              %80 = vst [vmem:[%s64 + $0x38] sm:$0xff] %v79
              %v81 = vld [vmem:[%s63 + $0x80] sm:$0xff]
              %82 = vst [vmem:[%s64 + $0x40] sm:$0xff] %v81
              %v83 = vld [vmem:[%s63 + $0x90] sm:$0xff]
              %84 = vst [vmem:[%s64 + $0x48] sm:$0xff] %v83
              %v85 = vld [vmem:[%s63 + $0xa0] sm:$0xff]
              %86 = vst [vmem:[%s64 + $0x50] sm:$0xff] %v85
              %v87 = vld [vmem:[%s63 + $0xb0] sm:$0xff]
              %88 = vst [vmem:[%s64 + $0x58] sm:$0xff] %v87
              %v89 = vld [vmem:[%s63 + $0xc0] sm:$0xff]
              %90 = vst [vmem:[%s64 + $0x60] sm:$0xff] %v89
              %v91 = vld [vmem:[%s63 + $0xd0] sm:$0xff]
              %92 = vst [vmem:[%s64 + $0x68] sm:$0xff] %v91
              %v93 = vld [vmem:[%s63 + $0xe0] sm:$0xff]
              %94 = vst [vmem:[%s64 + $0x70] sm:$0xff] %v93
              %v95 = vld [vmem:[%s63 + $0xf0] sm:$0xff]
              %96 = vst [vmem:[%s64 + $0x78] sm:$0xff] %v95
            $region33: #{identity_shortcut_forward.1} parent=27 // loop_footer
              %s62 = sadd.s32 1, %s58
            $region34: #{identity_shortcut_forward.1} parent=27 // loop_footer_branch
              %57 = sbr.rel target = $region30
            $region35: #{identity_shortcut_forward.1} parent=27 // loop_exit
              _
          $region28: #{identity_shortcut_forward.1} parent=12 // pred_fallthru
            _
          // Predicated region
          $region36: #{identity_shortcut_forward.1} parent=12 // pred_check
            _
          $region37: #{identity_shortcut_forward.1} parent=12 // pred_check_branch
            %98 = sbr.rel target = $region39
          $region38: #{identity_shortcut_forward.1} parent=12 // pred_region
            _
          $region39: #{identity_shortcut_forward.1} parent=12 // pred_fallthru
            _
        $region13: #{identity_shortcut_forward.1} parent=8 // pred_fallthru
          _
        // Predicated region
        $region14: #{identity_shortcut_forward.1} parent=8 // pred_check
          _
        $region15: #{identity_shortcut_forward.1} parent=8 // pred_check_branch
          %13 = sbr.rel target = $region17
        $region16: #{identity_shortcut_forward.1} parent=8 // pred_region
          loop: start=0, step=1, limit=1
          $region18: #{identity_shortcut_forward.1} parent=16 // loop_pre_header
            _
          $region19: #{identity_shortcut_forward.1} parent=16 // loop_header
            %s16 = sphi 0, %s20
            %p17 = scmp.ge.s32.totalorder %s16, 1
            %s21 = sphi %s0, %s0
            %s22 = sphi [#allocation2], [#allocation2]
          $region20: #{identity_shortcut_forward.1} parent=16 // loop_header_branch
            %19 = sbr.rel (%p17) target = $region24
          $region21: #{identity_shortcut_forward.1} parent=16 // loop_body
            %v23 = vld [vmem:[%s21] sm:$0xff]
            %24 = vst [vmem:[%s22] sm:$0xff] %v23
            %v25 = vld [vmem:[%s21 + $0x10] sm:$0xff]
            %26 = vst [vmem:[%s22 + $0x8] sm:$0xff] %v25
            %v27 = vld [vmem:[%s21 + $0x20] sm:$0xff]
            %28 = vst [vmem:[%s22 + $0x10] sm:$0xff] %v27
            %v29 = vld [vmem:[%s21 + $0x30] sm:$0xff]
            %30 = vst [vmem:[%s22 + $0x18] sm:$0xff] %v29
            %v31 = vld [vmem:[%s21 + $0x40] sm:$0xff]
            %32 = vst [vmem:[%s22 + $0x20] sm:$0xff] %v31
            %v33 = vld [vmem:[%s21 + $0x50] sm:$0xff]
            %34 = vst [vmem:[%s22 + $0x28] sm:$0xff] %v33
            %v35 = vld [vmem:[%s21 + $0x60] sm:$0xff]
            %36 = vst [vmem:[%s22 + $0x30] sm:$0xff] %v35
            %v37 = vld [vmem:[%s21 + $0x70] sm:$0xff]
            %38 = vst [vmem:[%s22 + $0x38] sm:$0xff] %v37
            %v39 = vld [vmem:[%s21 + $0x80] sm:$0xff]
            %40 = vst [vmem:[%s22 + $0x40] sm:$0xff] %v39
            %v41 = vld [vmem:[%s21 + $0x90] sm:$0xff]
            %42 = vst [vmem:[%s22 + $0x48] sm:$0xff] %v41
            %v43 = vld [vmem:[%s21 + $0xa0] sm:$0xff]
            %44 = vst [vmem:[%s22 + $0x50] sm:$0xff] %v43
            %v45 = vld [vmem:[%s21 + $0xb0] sm:$0xff]
            %46 = vst [vmem:[%s22 + $0x58] sm:$0xff] %v45
            %v47 = vld [vmem:[%s21 + $0xc0] sm:$0xff]
            %48 = vst [vmem:[%s22 + $0x60] sm:$0xff] %v47
            %v49 = vld [vmem:[%s21 + $0xd0] sm:$0xff]
            %50 = vst [vmem:[%s22 + $0x68] sm:$0xff] %v49
            %v51 = vld [vmem:[%s21 + $0xe0] sm:$0xff]
            %52 = vst [vmem:[%s22 + $0x70] sm:$0xff] %v51
            %v53 = vld [vmem:[%s21 + $0xf0] sm:$0xff]
            %54 = vst [vmem:[%s22 + $0x78] sm:$0xff] %v53
          $region22: #{identity_shortcut_forward.1} parent=16 // loop_footer
            %s20 = sadd.s32 1, %s16
          $region23: #{identity_shortcut_forward.1} parent=16 // loop_footer_branch
            %15 = sbr.rel target = $region19
          $region24: #{identity_shortcut_forward.1} parent=16 // loop_exit
            _
        $region17: #{identity_shortcut_forward.1} parent=8 // pred_fallthru
          _
      $region9: #{identity_shortcut_forward.1} parent=4 // pred_fallthru
        _
      %99 = vnop
    $region5: #{identity_shortcut_forward.1} parent=1 // pred_fallthru
      _
    // Predicated region
    $region40: #{identity_shortcut_forward.1} parent=1 // pred_check
      _
    $region41: #{identity_shortcut_forward.1} parent=1 // pred_check_branch
      %101 = sbr.rel (0) target = $region43
    $region42: #{identity_shortcut_forward.1} parent=1 // pred_region
      _
    $region43: #{identity_shortcut_forward.1} parent=1 // pred_fallthru
      _
    %v102 = vld [vmem:[#allocation2] sm:$0xff]
    %v103 = vld [vmem:[#allocation2 + $0x8] sm:$0xff]
    %v104 = vld [vmem:[#allocation2 + $0x10] sm:$0xff]
    %v105 = vld [vmem:[#allocation2 + $0x18] sm:$0xff]
    %v106 = vld [vmem:[#allocation2 + $0x20] sm:$0xff]
    %v107 = vld [vmem:[#allocation2 + $0x28] sm:$0xff]
    %v108 = vld [vmem:[#allocation2 + $0x30] sm:$0xff]
    %v109 = vld [vmem:[#allocation2 + $0x38] sm:$0xff]
    %v110 = vld [vmem:[#allocation2 + $0x40] sm:$0xff]
    %v111 = vld [vmem:[#allocation2 + $0x48] sm:$0xff]
    %v112 = vld [vmem:[#allocation2 + $0x50] sm:$0xff]
    %v113 = vld [vmem:[#allocation2 + $0x58] sm:$0xff]
    %v114 = vld [vmem:[#allocation2 + $0x60] sm:$0xff]
    %v115 = vld [vmem:[#allocation2 + $0x68] sm:$0xff]
    %v116 = vld [vmem:[#allocation2 + $0x70] sm:$0xff]
    %v117 = vld [vmem:[#allocation2 + $0x78] sm:$0xff]
    %vm118 = vcmask 31744
    %v119 = vsel %vm118, %v102, 0.0
    %v120 = vsel %vm118, %v103, 0.0
    %v121 = vsel %vm118, %v104, 0.0
    %v122 = vsel %vm118, %v105, 0.0
    %v123 = vsel %vm118, %v106, 0.0
    %v124 = vsel %vm118, %v107, 0.0
    %v125 = vsel %vm118, %v108, 0.0
    %v126 = vsel %vm118, %v109, 0.0
    %v127 = vsel %vm118, %v110, 0.0
    %v128 = vsel %vm118, %v111, 0.0
    %v129 = vsel %vm118, %v112, 0.0
    %v130 = vsel %vm118, %v113, 0.0
    %v131 = vsel %vm118, %v114, 0.0
    %v132 = vsel %vm118, %v115, 0.0
    %v133 = vsel %vm118, %v116, 0.0
    %v134 = vsel %vm118, %v117, 0.0
    %vm135 = vcmask 64512
    %136 = vst.msk [vmem:[%s1] sm:$0xff] %vm135, %v119
    %137 = vst.msk [vmem:[%s1 + $0x8] sm:$0xff] %vm135, %v120
    %138 = vst.msk [vmem:[%s1 + $0x10] sm:$0xff] %vm135, %v121
    %139 = vst.msk [vmem:[%s1 + $0x18] sm:$0xff] %vm135, %v122
    %140 = vst.msk [vmem:[%s1 + $0x20] sm:$0xff] %vm135, %v123
    %141 = vst.msk [vmem:[%s1 + $0x28] sm:$0xff] %vm135, %v124
    %142 = vst.msk [vmem:[%s1 + $0x30] sm:$0xff] %vm135, %v125
    %143 = vst.msk [vmem:[%s1 + $0x38] sm:$0xff] %vm135, %v126
    %144 = vst.msk [vmem:[%s1 + $0x40] sm:$0xff] %vm135, %v127
    %145 = vst.msk [vmem:[%s1 + $0x48] sm:$0xff] %vm135, %v128
    %146 = vst.msk [vmem:[%s1 + $0x50] sm:$0xff] %vm135, %v129
    %147 = vst.msk [vmem:[%s1 + $0x58] sm:$0xff] %vm135, %v130
    %148 = vst.msk [vmem:[%s1 + $0x60] sm:$0xff] %vm135, %v131
    %149 = vst.msk [vmem:[%s1 + $0x68] sm:$0xff] %vm135, %v132
    %150 = vst.msk [vmem:[%s1 + $0x70] sm:$0xff] %vm135, %v133
    %151 = vst.msk [vmem:[%s1 + $0x78] sm:$0xff] %vm135, %v134
    // Predicated region
    $region44: #{identity_shortcut_forward.1} parent=1 // pred_check
      _
    $region45: #{identity_shortcut_forward.1} parent=1 // pred_check_branch
      %153 = sbr.rel (0) target = $region47
    $region46: #{identity_shortcut_forward.1} parent=1 // pred_region
      _
    $region47: #{identity_shortcut_forward.1} parent=1 // pred_fallthru
      _
    // Predicated region
    $region48: #{identity_shortcut_forward.1} parent=1 // pred_check
      _
    $region49: #{identity_shortcut_forward.1} parent=1 // pred_check_branch
      %155 = sbr.rel (0) target = $region51
    $region50: #{identity_shortcut_forward.1} parent=1 // pred_region
      _
    $region51: #{identity_shortcut_forward.1} parent=1 // pred_fallthru
      _

</llo_original>
